<compile_context>
chip_gen: v5e
topology: v5e:2x2
jax: 0.10.0
libtpu: 0.0.40
codegen_flags: <defaults>
</compile_context>

<pallas_src>
import functools

import jax
import jax.numpy as jnp
from jax.experimental import pallas as pl
from jax.experimental.pallas import tpu as pltpu

_LANES = 128


def _round_up(n, m):
    return ((n + m - 1) // m) * m


def _leaky_relu(x, slope):
    return jnp.where(x > 0, x, slope * x)


def _mlp_kernel(x_ref, w_ref, v_ref, o_ref, *, slope):
    # x_ref: [TB, 128]      latent features zero-padded to 128 lanes
    # w_ref: [2, 128, 128]  w_ref[0] = W1 (padded), w_ref[1] = W2 (padded)
    # v_ref: [4, 128]       rows: b1, b2, w3 (as a row), b3 (replicated on lanes)
    # o_ref: [TB, 128]      logit broadcast across all 128 lanes (lane-dense)
    x = x_ref[...]
    w1 = w_ref[0]
    w2 = w_ref[1]
    b1 = v_ref[pl.ds(0, 1), :]
    b2 = v_ref[pl.ds(1, 1), :]
    w3r = v_ref[pl.ds(2, 1), :]
    b3 = v_ref[pl.ds(3, 1), :]

    hp = jax.lax.Precision.HIGHEST
    h = jnp.dot(x, w1, preferred_element_type=jnp.float32, precision=hp) + b1
    h = _leaky_relu(h, slope)
    h = jnp.dot(h, w2, preferred_element_type=jnp.float32, precision=hp) + b2
    h = _leaky_relu(h, slope)

    # Final Linear(hidden -> 1): VPU multiply + XLU lane reduce.  Padded lanes
    # of h and w3r are zero, so they contribute nothing.
    s = jnp.sum(h * w3r, axis=-1, keepdims=True)          # [TB, 1]

    # Lane-dense store: broadcast the per-row scalar across 128 lanes (+ bias).
    o_ref[...] = (s + b3).astype(o_ref.dtype)


def latent_discriminator_forward(x, params, *, slope=0.01, block_b=256):
    """x: [B, latent_dim] float32. Returns [B] float32 (torch.squeeze for B>1)."""
    w1, b1, w2, b2, w3, b3 = params
    B, latent_dim = x.shape
    h1, h2 = w1.shape[1], w2.shape[1]
    assert w3.shape[1] == 1
    F = _LANES
    assert latent_dim <= F and h1 <= F and h2 <= F, "single-tile feature dims only"

    def pad2(a, rows, cols):
        return jnp.pad(a, ((0, rows - a.shape[0]), (0, cols - a.shape[1])))

    # Pack weights into one [2, 128, 128] buffer (zero padding keeps math exact).
    w_packed = jnp.stack([pad2(w1, F, F), pad2(w2, F, F)], axis=0)
    # Pack bias/row vectors into one [4, 128] buffer.
    v_packed = jnp.concatenate(
        [pad2(b1, 1, F),
         pad2(b2, 1, F),
         pad2(w3.T, 1, F),
         jnp.broadcast_to(b3.reshape(1, 1), (1, F))],
        axis=0,
    )

    # Batch tiling: TB multiple of 8, up to block_b; weights stay VMEM-resident.
    TB = min(_round_up(block_b, 8), _round_up(B, 8))
    B_pad = _round_up(B, TB)
    xp = jnp.pad(x, ((0, B_pad - B), (0, F - latent_dim)))

    out = pl.pallas_call(
        functools.partial(_mlp_kernel, slope=slope),
        out_shape=jax.ShapeDtypeStruct((B_pad, F), jnp.float32),
        grid_spec=pltpu.PrefetchScalarGridSpec(
            num_scalar_prefetch=0,
            grid=(B_pad // TB,),
            in_specs=[
                pl.BlockSpec((TB, F), lambda i: (i, 0)),
                pl.BlockSpec((2, F, F), lambda i: (0, 0, 0)),  # VMEM-resident
                pl.BlockSpec((4, F), lambda i: (0, 0)),        # VMEM-resident
            ],
            out_specs=pl.BlockSpec((TB, F), lambda i: (i, 0)),
        ),
        compiler_params=pltpu.CompilerParams(
            dimension_semantics=("parallel",)),
    )(xp, w_packed, v_packed)

    # Column 0 of each real row holds the logit; matches torch.squeeze([B,1]) -> [B].
    return out[:B, 0]


def init_params(key, latent_dim, layer_dims):
    """Deterministic Kaiming-uniform-ish init. Final output dim is 1."""
    dims = [latent_dim] + list(layer_dims) + [1]
    params = []
    for i in range(len(dims) - 1):
        key, wk, bk = jax.random.split(key, 3)
        fan_in = dims[i]
        bound = 1.0 / jnp.sqrt(fan_in)
        w = jax.random.uniform(wk, (dims[i], dims[i + 1]), jnp.float32, -bound, bound)
        b = jax.random.uniform(bk, (1, dims[i + 1]), jnp.float32, -bound, bound)
        params += [w, b]
    return tuple(params)


def reference_forward(x, params, slope=0.01):
    """Plain-JAX reference (true f32 matmuls) for correctness check."""
    w1, b1, w2, b2, w3, b3 = params
    hp = jax.lax.Precision.HIGHEST
    h = _leaky_relu(jnp.dot(x, w1, precision=hp) + b1, slope)
    h = _leaky_relu(jnp.dot(h, w2, precision=hp) + b2, slope)
    out = jnp.dot(h, w3, precision=hp) + b3
    return jnp.squeeze(out, axis=-1)


if __name__ == "__main__":
    key = jax.random.PRNGKey(0)
    B, latent_dim = 8, 32
    layers = [64, 64]  # args['layers']; mlp dims become [32, 64, 64, 1]

    key, xk, pk = jax.random.split(key, 3)
    x = jax.random.normal(xk, (B, latent_dim), jnp.float32)
    params = init_params(pk, latent_dim, layers)

    out = latent_discriminator_forward(x, params)
    out = jax.block_until_ready(out)

    ref = reference_forward(x, params)
    assert out.shape == (B,), out.shape
    assert jnp.allclose(out, ref, atol=1e-4, rtol=1e-4), (out, ref)

    print("KERNEL_OK")
</pallas_src>

<mosaic_0001>
module attributes {stable_mosaic.version = 11 : i64} {
  func.func @_mlp_kernel(%arg0: i32, %arg1: memref<8x128xf32, #tpu.memory_space<vmem>>, %arg2: memref<2x128x128xf32, #tpu.memory_space<vmem>>, %arg3: memref<4x128xf32, #tpu.memory_space<vmem>>, %arg4: memref<8x128xf32, #tpu.memory_space<vmem>>) attributes {dimension_semantics = [#tpu.dimension_semantics<parallel>], iteration_bounds = array<i64: 1>, scalar_prefetch = 0 : i64, scratch_operands = 0 : i64, tpu.core_type = #tpu.core_type<tc>, window_params = [{transform_indices = @transform_0, window_bounds = array<i64: 8, 128>}, {pipeline_mode = #tpu.pipeline_mode<synchronous>, transform_indices = @transform_1, window_bounds = array<i64: 2, 128, 128>}, {pipeline_mode = #tpu.pipeline_mode<synchronous>, transform_indices = @transform_2, window_bounds = array<i64: 4, 128>}, {transform_indices = @transform_3, window_bounds = array<i64: 8, 128>}]} {
    %c0 = arith.constant 0 : index
    %c0_0 = arith.constant 0 : index
    %0 = vector.load %arg1[%c0, %c0_0] : memref<8x128xf32, #tpu.memory_space<vmem>>, vector<8x128xf32>
    %c0_1 = arith.constant 0 : index
    %c0_2 = arith.constant 0 : index
    %c0_3 = arith.constant 0 : index
    %1 = vector.load %arg2[%c0_1, %c0_2, %c0_3] : memref<2x128x128xf32, #tpu.memory_space<vmem>>, vector<1x128x128xf32>
    %2 = vector.shape_cast %1 : vector<1x128x128xf32> to vector<128x128xf32>
    %c1 = arith.constant 1 : index
    %c0_4 = arith.constant 0 : index
    %c0_5 = arith.constant 0 : index
    %3 = vector.load %arg2[%c1, %c0_4, %c0_5] : memref<2x128x128xf32, #tpu.memory_space<vmem>>, vector<1x128x128xf32>
    %4 = vector.shape_cast %3 : vector<1x128x128xf32> to vector<128x128xf32>
    %c0_6 = arith.constant 0 : index
    %c0_7 = arith.constant 0 : index
    %5 = vector.load %arg3[%c0_6, %c0_7] : memref<4x128xf32, #tpu.memory_space<vmem>>, vector<1x128xf32>
    %c1_8 = arith.constant 1 : index
    %c0_9 = arith.constant 0 : index
    %6 = vector.load %arg3[%c1_8, %c0_9] : memref<4x128xf32, #tpu.memory_space<vmem>>, vector<1x128xf32>
    %c2 = arith.constant 2 : index
    %c0_10 = arith.constant 0 : index
    %7 = vector.load %arg3[%c2, %c0_10] : memref<4x128xf32, #tpu.memory_space<vmem>>, vector<1x128xf32>
    %c3 = arith.constant 3 : index
    %c0_11 = arith.constant 0 : index
    %8 = vector.load %arg3[%c3, %c0_11] : memref<4x128xf32, #tpu.memory_space<vmem>>, vector<1x128xf32>
    %cst = arith.constant dense<0.000000e+00> : vector<8x128xf32>
    %9 = tpu.matmul %0, %2, %cst {dimension_numbers = #tpu.dot_dimension_numbers<[1], [0], [0], [1], [0, 0, 1, 1], [], []>, precision = #tpu.contract_precision<fp32>} : vector<8x128xf32>, vector<128x128xf32>, vector<8x128xf32> -> vector<8x128xf32>
    %10 = vector.broadcast %5 : vector<1x128xf32> to vector<8x128xf32>
    %11 = arith.addf %9, %10 : vector<8x128xf32>
    %cst_12 = arith.constant 0.000000e+00 : f32
    %12 = vector.broadcast %cst_12 : f32 to vector<8x128xf32>
    %13 = arith.cmpf ogt, %11, %12 : vector<8x128xf32>
    %cst_13 = arith.constant 0.00999999977 : f32
    %14 = vector.broadcast %cst_13 : f32 to vector<8x128xf32>
    %15 = arith.mulf %14, %11 : vector<8x128xf32>
    %16 = arith.select %13, %11, %15 : vector<8x128xi1>, vector<8x128xf32>
    %cst_14 = arith.constant dense<0.000000e+00> : vector<8x128xf32>
    %17 = tpu.matmul %16, %4, %cst_14 {dimension_numbers = #tpu.dot_dimension_numbers<[1], [0], [0], [1], [0, 0, 1, 1], [], []>, precision = #tpu.contract_precision<fp32>} : vector<8x128xf32>, vector<128x128xf32>, vector<8x128xf32> -> vector<8x128xf32>
    %18 = vector.broadcast %6 : vector<1x128xf32> to vector<8x128xf32>
    %19 = arith.addf %17, %18 : vector<8x128xf32>
    %cst_15 = arith.constant 0.000000e+00 : f32
    %20 = vector.broadcast %cst_15 : f32 to vector<8x128xf32>
    %21 = arith.cmpf ogt, %19, %20 : vector<8x128xf32>
    %cst_16 = arith.constant 0.00999999977 : f32
    %22 = vector.broadcast %cst_16 : f32 to vector<8x128xf32>
    %23 = arith.mulf %22, %19 : vector<8x128xf32>
    %24 = arith.select %21, %19, %23 : vector<8x128xi1>, vector<8x128xf32>
    %25 = vector.broadcast %7 : vector<1x128xf32> to vector<8x128xf32>
    %26 = arith.mulf %24, %25 : vector<8x128xf32>
    %cst_17 = arith.constant dense<0.000000e+00> : vector<8xf32>
    %27 = vector.multi_reduction <add>, %26, %cst_17 [1] : vector<8x128xf32> to vector<8xf32>
    %28 = vector.shape_cast %27 : vector<8xf32> to vector<8x1xf32>
    %29 = vector.broadcast %28 : vector<8x1xf32> to vector<8x128xf32>
    %30 = vector.broadcast %8 : vector<1x128xf32> to vector<8x128xf32>
    %31 = arith.addf %29, %30 : vector<8x128xf32>
    %c0_18 = arith.constant 0 : index
    %c0_19 = arith.constant 0 : index
    %32 = vector.load %arg4[%c0_18, %c0_19] : memref<8x128xf32, #tpu.memory_space<vmem>>, vector<8x128xf32>
    tpu.vector_store %arg4[%c0_18, %c0_19], %31 {strides = array<i32>} : memref<8x128xf32, #tpu.memory_space<vmem>>, vector<8x128xf32>,
    return
  }
  func.func @transform_0(%arg0: i32) -> (i32, i32) {
    %c0_i32 = arith.constant 0 : i32
    %c0_i32_0 = arith.constant 0 : i32
    return %arg0, %c0_i32 : i32, i32
  }
  func.func @transform_1(%arg0: i32) -> (i32, i32, i32) {
    %c0_i32 = arith.constant 0 : i32
    %c0_i32_0 = arith.constant 0 : i32
    %c0_i32_1 = arith.constant 0 : i32
    %c0_i32_2 = arith.constant 0 : i32
    return %c0_i32, %c0_i32_0, %c0_i32_1 : i32, i32, i32
  }
  func.func @transform_2(%arg0: i32) -> (i32, i32) {
    %c0_i32 = arith.constant 0 : i32
    %c0_i32_0 = arith.constant 0 : i32
    %c0_i32_1 = arith.constant 0 : i32
    return %c0_i32, %c0_i32_0 : i32, i32
  }
  func.func @transform_3(%arg0: i32) -> (i32, i32) {
    %c0_i32 = arith.constant 0 : i32
    %c0_i32_0 = arith.constant 0 : i32
    return %arg0, %c0_i32 : i32, i32
  }
}

</mosaic_0001>

<llo_original>
// kernel: tpu_custom_call.1
$region0: #{tpu_custom_call.1}
  #allocation0 [shape = 'u32[]', space=smem, size = 0x4, offset = 0x4, fixed_abs, tag = 'smem constant byte address 0x4 - core index']
  #allocation1 [shape = 'u32[72,128]{1,0:T(1,128)}', space=vmem, size = 0x9000, scoped, tag = 'internal scratch']
  %s0 = inlined_call_operand.hbm [shape: f32[8,128], index: 0, kind: input, shape index: {}]
  %s1 = inlined_call_operand.hbm [shape: f32[2,128,128], index: 1, kind: input, shape index: {}]
  %s2 = inlined_call_operand.hbm [shape: f32[4,128], index: 2, kind: input, shape index: {}]
  %s3 = inlined_call_operand.hbm [shape: f32[8,128], index: 3, kind: output, shape index: {}]
  %s4 = sld [smem:[#allocation0]]
  $region34: #{tpu_custom_call.1} parent=0
    _
  %s6 = ssub.s32 1, %s4
  %s7 = scalar_select 0, %s6, %s4
  $region1: #{tpu_custom_call.1} parent=0
    #allocation2 [shape = 'u8[4096]{0}', space=vmem, size = 0x1000, scoped, tag = 'input window, operand 0, single buffered']
    #allocation3 [shape = 's32[1]{0}', space=sflag, size = 0x4, scoped, tag = 'scoped memory for tpu_custom_call.1']
    #allocation4 [shape = 's32[1]{0}', space=sflag, size = 0x4, scoped, tag = 'scoped memory for tpu_custom_call.1']
    #allocation5 [shape = 'u8[131072]{0}', space=vmem, size = 0x20000, scoped, tag = 'input window, operand 1, single buffered']
    #allocation6 [shape = 's32[1]{0}', space=sflag, size = 0x4, scoped, tag = 'scoped memory for tpu_custom_call.1']
    #allocation7 [shape = 'u8[2048]{0}', space=vmem, size = 0x800, scoped, tag = 'input window, operand 2, single buffered']
    #allocation8 [shape = 'u8[4096]{0}', space=vmem, size = 0x1000, scoped, tag = 'output window, operand 0, single buffered']
    %8 = vsyncpa [#allocation3], 0
    %9 = vsyncpa [#allocation6], 0
    %10 = vsyncpa [#allocation4], 0
    // Predicated region
    $region2: #{tpu_custom_call.1} parent=1 // pred_check
      _
    $region3: #{tpu_custom_call.1} parent=1 // pred_check_branch
      %12 = sbr.rel (0) target = $region5
    $region4: #{tpu_custom_call.1} parent=1 // pred_region
      %14 = vsyncadd [#allocation3], 0
      %s16 = sshll.u32 %s0, 4
      %s17 = int_to_ptr.hbm [resolvable:$true] %s16
      %s18 = sshll.u32 [#allocation2], 4
      %s19 = int_to_ptr.vmem [resolvable:$true] %s18
      %21 = dma.hbm_to_vmem [thread:$0]  %s17, 128, %s19, [#allocation3]
    $region5: #{tpu_custom_call.1} parent=1 // pred_fallthru
      _
    // Predicated region
    $region6: #{tpu_custom_call.1} parent=1 // pred_check
      _
    $region7: #{tpu_custom_call.1} parent=1 // pred_check_branch
      %23 = sbr.rel (0) target = $region9
    $region8: #{tpu_custom_call.1} parent=1 // pred_region
      %25 = vsyncadd [#allocation6], 0
      %s26 = sshll.u32 %s1, 4
      %s27 = int_to_ptr.hbm [resolvable:$true] %s26
      %s28 = sshll.u32 [#allocation5], 4
      %s29 = int_to_ptr.vmem [resolvable:$true] %s28
      %34 = dma.hbm_to_vmem [thread:$0]  %s27, 4096, %s29, [#allocation6], 128, 128, 8
    $region9: #{tpu_custom_call.1} parent=1 // pred_fallthru
      _
    // Predicated region
    $region10: #{tpu_custom_call.1} parent=1 // pred_check
      _
    $region11: #{tpu_custom_call.1} parent=1 // pred_check_branch
      %36 = sbr.rel (0) target = $region13
    $region12: #{tpu_custom_call.1} parent=1 // pred_region
      %38 = vsyncadd [#allocation6], 0
      %s40 = sshll.u32 %s2, 4
      %s41 = int_to_ptr.hbm [resolvable:$true] %s40
      %s42 = sshll.u32 [#allocation7], 4
      %s43 = int_to_ptr.vmem [resolvable:$true] %s42
      %45 = dma.hbm_to_vmem [thread:$0]  %s41, 64, %s43, [#allocation6]
    $region13: #{tpu_custom_call.1} parent=1 // pred_fallthru
      _
    // Predicated region
    $region14: #{tpu_custom_call.1} parent=1 // pred_check
      _
    $region15: #{tpu_custom_call.1} parent=1 // pred_check_branch
      %47 = sbr.rel (0) target = $region17
    $region16: #{tpu_custom_call.1} parent=1 // pred_region
      %49 = dma.done [#allocation3], 128
    $region17: #{tpu_custom_call.1} parent=1 // pred_fallthru
      _
    // Predicated region
    $region18: #{tpu_custom_call.1} parent=1 // pred_check
      _
    $region19: #{tpu_custom_call.1} parent=1 // pred_check_branch
      %51 = sbr.rel (0) target = $region21
    $region20: #{tpu_custom_call.1} parent=1 // pred_region
      %53 = dma.done [#allocation6], 4096
    $region21: #{tpu_custom_call.1} parent=1 // pred_fallthru
      _
    // Predicated region
    $region22: #{tpu_custom_call.1} parent=1 // pred_check
      _
    $region23: #{tpu_custom_call.1} parent=1 // pred_check_branch
      %55 = sbr.rel (0) target = $region25
    $region24: #{tpu_custom_call.1} parent=1 // pred_region
      %57 = dma.done [#allocation6], 64
    $region25: #{tpu_custom_call.1} parent=1 // pred_fallthru
      _
    %v58 = vld [vmem:[#allocation2] sm:$0xff]
    %v59 = vld [vmem:[#allocation5] sm:$0xff]
    %v60 = vld [vmem:[#allocation5 + $0x8] sm:$0xff]
    %v61 = vld [vmem:[#allocation5 + $0x10] sm:$0xff]
    %v62 = vld [vmem:[#allocation5 + $0x18] sm:$0xff]
    %v63 = vld [vmem:[#allocation5 + $0x20] sm:$0xff]
    %v64 = vld [vmem:[#allocation5 + $0x28] sm:$0xff]
    %v65 = vld [vmem:[#allocation5 + $0x30] sm:$0xff]
    %v66 = vld [vmem:[#allocation5 + $0x38] sm:$0xff]
    %v67 = vld [vmem:[#allocation5 + $0x40] sm:$0xff]
    %v68 = vld [vmem:[#allocation5 + $0x48] sm:$0xff]
    %v69 = vld [vmem:[#allocation5 + $0x50] sm:$0xff]
    %v70 = vld [vmem:[#allocation5 + $0x58] sm:$0xff]
    %v71 = vld [vmem:[#allocation5 + $0x60] sm:$0xff]
    %v72 = vld [vmem:[#allocation5 + $0x68] sm:$0xff]
    %v73 = vld [vmem:[#allocation5 + $0x70] sm:$0xff]
    %v74 = vld [vmem:[#allocation5 + $0x78] sm:$0xff]
    %s75 = scalar_lea.vmem [#allocation5], 128
    %v76 = vld [vmem:[%s75] sm:$0xff]
    %v77 = vld [vmem:[%s75 + $0x8] sm:$0xff]
    %v78 = vld [vmem:[%s75 + $0x10] sm:$0xff]
    %v79 = vld [vmem:[%s75 + $0x18] sm:$0xff]
    %v80 = vld [vmem:[%s75 + $0x20] sm:$0xff]
    %v81 = vld [vmem:[%s75 + $0x28] sm:$0xff]
    %v82 = vld [vmem:[%s75 + $0x30] sm:$0xff]
    %v83 = vld [vmem:[%s75 + $0x38] sm:$0xff]
    %v84 = vld [vmem:[%s75 + $0x40] sm:$0xff]
    %v85 = vld [vmem:[%s75 + $0x48] sm:$0xff]
    %v86 = vld [vmem:[%s75 + $0x50] sm:$0xff]
    %v87 = vld [vmem:[%s75 + $0x58] sm:$0xff]
    %v88 = vld [vmem:[%s75 + $0x60] sm:$0xff]
    %v89 = vld [vmem:[%s75 + $0x68] sm:$0xff]
    %v90 = vld [vmem:[%s75 + $0x70] sm:$0xff]
    %v91 = vld [vmem:[%s75 + $0x78] sm:$0xff]
    %v92 = vld [vmem:[#allocation7] sm:$0x1]
    %v93 = vld [vmem:[#allocation7 + $0x1] sm:$0x1]
    %v94 = vld [vmem:[#allocation7 + $0x2] sm:$0x1]
    %v95 = vld [vmem:[#allocation7 + $0x3] sm:$0x1]
    %v96 = vperm.slane %v92, 0
    %v97 = vand.u32 %v74, 4294901760
    %98 = vmatpush.msra.mxu0 %v97
    %v99 = vand.u32 %v73, 4294901760
    %100 = vmatpush.msra.mxu0 %v99
    %v101 = vand.u32 %v72, 4294901760
    %102 = vmatpush.msra.mxu0 %v101
    %v103 = vand.u32 %v71, 4294901760
    %104 = vmatpush.msra.mxu0 %v103
    %v105 = vand.u32 %v70, 4294901760
    %106 = vmatpush.msra.mxu0 %v105
    %v107 = vand.u32 %v69, 4294901760
    %108 = vmatpush.msra.mxu0 %v107
    %v109 = vand.u32 %v68, 4294901760
    %110 = vmatpush.msra.mxu0 %v109
    %v111 = vand.u32 %v67, 4294901760
    %112 = vmatpush.msra.mxu0 %v111
    %v113 = vand.u32 %v66, 4294901760
    %114 = vmatpush.msra.mxu0 %v113
    %v115 = vand.u32 %v65, 4294901760
    %116 = vmatpush.msra.mxu0 %v115
    %v117 = vand.u32 %v64, 4294901760
    %118 = vmatpush.msra.mxu0 %v117
    %v119 = vand.u32 %v63, 4294901760
    %120 = vmatpush.msra.mxu0 %v119
    %v121 = vand.u32 %v62, 4294901760
    %122 = vmatpush.msra.mxu0 %v121
    %v123 = vand.u32 %v61, 4294901760
    %124 = vmatpush.msra.mxu0 %v123
    %v125 = vand.u32 %v60, 4294901760
    %126 = vmatpush.msra.mxu0 %v125
    %v127 = vand.u32 %v59, 4294901760
    %128 = vmatpush.msra.mxu0 %v127
    %v129 = vand.u32 %v58, 4294901760
    %v130 = vsub.f32 %v58, %v129
    %v131 = vand.u32 %v130, 4294901760
    %v132 = vsub.f32 %v130, %v131
    %v133 = vand.u32 %v132, 4294901760
    %134 = vmatmul.f32.gmra.mxu0 %v133
    %v135 = vpop.f32.mrf.mxu0
    %v136 = vadd.f32 %v96, %v135
    %137 = vdwg.mxu0
    %v138 = vand.u32 %v74, 4294901760
    %v139 = vsub.f32 %v74, %v138
    %v140 = vand.u32 %v139, 4294901760
    %v141 = vsub.f32 %v139, %v140
    %v142 = vand.u32 %v141, 4294901760
    %143 = vmatpush.msra.mxu0 %v142
    %v144 = vand.u32 %v73, 4294901760
    %v145 = vsub.f32 %v73, %v144
    %v146 = vand.u32 %v145, 4294901760
    %v147 = vsub.f32 %v145, %v146
    %v148 = vand.u32 %v147, 4294901760
    %149 = vmatpush.msra.mxu0 %v148
    %v150 = vand.u32 %v72, 4294901760
    %v151 = vsub.f32 %v72, %v150
    %v152 = vand.u32 %v151, 4294901760
    %v153 = vsub.f32 %v151, %v152
    %v154 = vand.u32 %v153, 4294901760
    %155 = vmatpush.msra.mxu0 %v154
    %v156 = vand.u32 %v71, 4294901760
    %v157 = vsub.f32 %v71, %v156
    %v158 = vand.u32 %v157, 4294901760
    %v159 = vsub.f32 %v157, %v158
    %v160 = vand.u32 %v159, 4294901760
    %161 = vmatpush.msra.mxu0 %v160
    %v162 = vand.u32 %v70, 4294901760
    %v163 = vsub.f32 %v70, %v162
    %v164 = vand.u32 %v163, 4294901760
    %v165 = vsub.f32 %v163, %v164
    %v166 = vand.u32 %v165, 4294901760
    %167 = vmatpush.msra.mxu0 %v166
    %v168 = vand.u32 %v69, 4294901760
    %v169 = vsub.f32 %v69, %v168
    %v170 = vand.u32 %v169, 4294901760
    %v171 = vsub.f32 %v169, %v170
    %v172 = vand.u32 %v171, 4294901760
    %173 = vmatpush.msra.mxu0 %v172
    %v174 = vand.u32 %v68, 4294901760
    %v175 = vsub.f32 %v68, %v174
    %v176 = vand.u32 %v175, 4294901760
    %v177 = vsub.f32 %v175, %v176
    %v178 = vand.u32 %v177, 4294901760
    %179 = vmatpush.msra.mxu0 %v178
    %v180 = vand.u32 %v67, 4294901760
    %v181 = vsub.f32 %v67, %v180
    %v182 = vand.u32 %v181, 4294901760
    %v183 = vsub.f32 %v181, %v182
    %v184 = vand.u32 %v183, 4294901760
    %185 = vmatpush.msra.mxu0 %v184
    %v186 = vand.u32 %v66, 4294901760
    %v187 = vsub.f32 %v66, %v186
    %v188 = vand.u32 %v187, 4294901760
    %v189 = vsub.f32 %v187, %v188
    %v190 = vand.u32 %v189, 4294901760
    %191 = vmatpush.msra.mxu0 %v190
    %v192 = vand.u32 %v65, 4294901760
    %v193 = vsub.f32 %v65, %v192
    %v194 = vand.u32 %v193, 4294901760
    %v195 = vsub.f32 %v193, %v194
    %v196 = vand.u32 %v195, 4294901760
    %197 = vmatpush.msra.mxu0 %v196
    %v198 = vand.u32 %v64, 4294901760
    %v199 = vsub.f32 %v64, %v198
    %v200 = vand.u32 %v199, 4294901760
    %v201 = vsub.f32 %v199, %v200
    %v202 = vand.u32 %v201, 4294901760
    %203 = vmatpush.msra.mxu0 %v202
    %v204 = vand.u32 %v63, 4294901760
    %v205 = vsub.f32 %v63, %v204
    %v206 = vand.u32 %v205, 4294901760
    %v207 = vsub.f32 %v205, %v206
    %v208 = vand.u32 %v207, 4294901760
    %209 = vmatpush.msra.mxu0 %v208
    %v210 = vand.u32 %v62, 4294901760
    %v211 = vsub.f32 %v62, %v210
    %v212 = vand.u32 %v211, 4294901760
    %v213 = vsub.f32 %v211, %v212
    %v214 = vand.u32 %v213, 4294901760
    %215 = vmatpush.msra.mxu0 %v214
    %v216 = vand.u32 %v61, 4294901760
    %v217 = vsub.f32 %v61, %v216
    %v218 = vand.u32 %v217, 4294901760
    %v219 = vsub.f32 %v217, %v218
    %v220 = vand.u32 %v219, 4294901760
    %221 = vmatpush.msra.mxu0 %v220
    %v222 = vand.u32 %v60, 4294901760
    %v223 = vsub.f32 %v60, %v222
    %v224 = vand.u32 %v223, 4294901760
    %v225 = vsub.f32 %v223, %v224
    %v226 = vand.u32 %v225, 4294901760
    %227 = vmatpush.msra.mxu0 %v226
    %v228 = vand.u32 %v59, 4294901760
    %v229 = vsub.f32 %v59, %v228
    %v230 = vand.u32 %v229, 4294901760
    %v231 = vsub.f32 %v229, %v230
    %v232 = vand.u32 %v231, 4294901760
    %233 = vmatpush.msra.mxu0 %v232
    %v234 = vand.u32 %v58, 4294901760
    %235 = vmatmul.f32.gmra.mxu0 %v234
    %v236 = vpop.f32.mrf.mxu0
    %v237 = vadd.f32 %v136, %v236
    %238 = vdwg.mxu0
    %v239 = vand.u32 %v74, 4294901760
    %v240 = vsub.f32 %v74, %v239
    %241 = vmatpush.msra.mxu0 %v240
    %v242 = vand.u32 %v73, 4294901760
    %v243 = vsub.f32 %v73, %v242
    %244 = vmatpush.msra.mxu0 %v243
    %v245 = vand.u32 %v72, 4294901760
    %v246 = vsub.f32 %v72, %v245
    %247 = vmatpush.msra.mxu0 %v246
    %v248 = vand.u32 %v71, 4294901760
    %v249 = vsub.f32 %v71, %v248
    %250 = vmatpush.msra.mxu0 %v249
    %v251 = vand.u32 %v70, 4294901760
    %v252 = vsub.f32 %v70, %v251
    %253 = vmatpush.msra.mxu0 %v252
    %v254 = vand.u32 %v69, 4294901760
    %v255 = vsub.f32 %v69, %v254
    %256 = vmatpush.msra.mxu0 %v255
    %v257 = vand.u32 %v68, 4294901760
    %v258 = vsub.f32 %v68, %v257
    %259 = vmatpush.msra.mxu0 %v258
    %v260 = vand.u32 %v67, 4294901760
    %v261 = vsub.f32 %v67, %v260
    %262 = vmatpush.msra.mxu0 %v261
    %v263 = vand.u32 %v66, 4294901760
    %v264 = vsub.f32 %v66, %v263
    %265 = vmatpush.msra.mxu0 %v264
    %v266 = vand.u32 %v65, 4294901760
    %v267 = vsub.f32 %v65, %v266
    %268 = vmatpush.msra.mxu0 %v267
    %v269 = vand.u32 %v64, 4294901760
    %v270 = vsub.f32 %v64, %v269
    %271 = vmatpush.msra.mxu0 %v270
    %v272 = vand.u32 %v63, 4294901760
    %v273 = vsub.f32 %v63, %v272
    %274 = vmatpush.msra.mxu0 %v273
    %v275 = vand.u32 %v62, 4294901760
    %v276 = vsub.f32 %v62, %v275
    %277 = vmatpush.msra.mxu0 %v276
    %v278 = vand.u32 %v61, 4294901760
    %v279 = vsub.f32 %v61, %v278
    %280 = vmatpush.msra.mxu0 %v279
    %v281 = vand.u32 %v60, 4294901760
    %v282 = vsub.f32 %v60, %v281
    %283 = vmatpush.msra.mxu0 %v282
    %v284 = vand.u32 %v59, 4294901760
    %v285 = vsub.f32 %v59, %v284
    %286 = vmatpush.msra.mxu0 %v285
    %v287 = vand.u32 %v58, 4294901760
    %v288 = vsub.f32 %v58, %v287
    %289 = vmatmul.f32.gmra.mxu0 %v288
    %v290 = vpop.f32.mrf.mxu0
    %v291 = vadd.f32 %v237, %v290
    %292 = vdwg.mxu0
    %v293 = vand.u32 %v74, 4294901760
    %294 = vmatpush.msra.mxu0 %v293
    %v295 = vand.u32 %v73, 4294901760
    %296 = vmatpush.msra.mxu0 %v295
    %v297 = vand.u32 %v72, 4294901760
    %298 = vmatpush.msra.mxu0 %v297
    %v299 = vand.u32 %v71, 4294901760
    %300 = vmatpush.msra.mxu0 %v299
    %v301 = vand.u32 %v70, 4294901760
    %302 = vmatpush.msra.mxu0 %v301
    %v303 = vand.u32 %v69, 4294901760
    %304 = vmatpush.msra.mxu0 %v303
    %v305 = vand.u32 %v68, 4294901760
    %306 = vmatpush.msra.mxu0 %v305
    %v307 = vand.u32 %v67, 4294901760
    %308 = vmatpush.msra.mxu0 %v307
    %v309 = vand.u32 %v66, 4294901760
    %310 = vmatpush.msra.mxu0 %v309
    %v311 = vand.u32 %v65, 4294901760
    %312 = vmatpush.msra.mxu0 %v311
    %v313 = vand.u32 %v64, 4294901760
    %314 = vmatpush.msra.mxu0 %v313
    %v315 = vand.u32 %v63, 4294901760
    %316 = vmatpush.msra.mxu0 %v315
    %v317 = vand.u32 %v62, 4294901760
    %318 = vmatpush.msra.mxu0 %v317
    %v319 = vand.u32 %v61, 4294901760
    %320 = vmatpush.msra.mxu0 %v319
    %v321 = vand.u32 %v60, 4294901760
    %322 = vmatpush.msra.mxu0 %v321
    %v323 = vand.u32 %v59, 4294901760
    %324 = vmatpush.msra.mxu0 %v323
    %v325 = vand.u32 %v58, 4294901760
    %v326 = vsub.f32 %v58, %v325
    %v327 = vand.u32 %v326, 4294901760
    %328 = vmatmul.f32.gmra.mxu0 %v327
    %v329 = vpop.f32.mrf.mxu0
    %v330 = vadd.f32 %v291, %v329
    %331 = vdwg.mxu0
    %v332 = vand.u32 %v74, 4294901760
    %v333 = vsub.f32 %v74, %v332
    %v334 = vand.u32 %v333, 4294901760
    %335 = vmatpush.msra.mxu0 %v334
    %v336 = vand.u32 %v73, 4294901760
    %v337 = vsub.f32 %v73, %v336
    %v338 = vand.u32 %v337, 4294901760
    %339 = vmatpush.msra.mxu0 %v338
    %v340 = vand.u32 %v72, 4294901760
    %v341 = vsub.f32 %v72, %v340
    %v342 = vand.u32 %v341, 4294901760
    %343 = vmatpush.msra.mxu0 %v342
    %v344 = vand.u32 %v71, 4294901760
    %v345 = vsub.f32 %v71, %v344
    %v346 = vand.u32 %v345, 4294901760
    %347 = vmatpush.msra.mxu0 %v346
    %v348 = vand.u32 %v70, 4294901760
    %v349 = vsub.f32 %v70, %v348
    %v350 = vand.u32 %v349, 4294901760
    %351 = vmatpush.msra.mxu0 %v350
    %v352 = vand.u32 %v69, 4294901760
    %v353 = vsub.f32 %v69, %v352
    %v354 = vand.u32 %v353, 4294901760
    %355 = vmatpush.msra.mxu0 %v354
    %v356 = vand.u32 %v68, 4294901760
    %v357 = vsub.f32 %v68, %v356
    %v358 = vand.u32 %v357, 4294901760
    %359 = vmatpush.msra.mxu0 %v358
    %v360 = vand.u32 %v67, 4294901760
    %v361 = vsub.f32 %v67, %v360
    %v362 = vand.u32 %v361, 4294901760
    %363 = vmatpush.msra.mxu0 %v362
    %v364 = vand.u32 %v66, 4294901760
    %v365 = vsub.f32 %v66, %v364
    %v366 = vand.u32 %v365, 4294901760
    %367 = vmatpush.msra.mxu0 %v366
    %v368 = vand.u32 %v65, 4294901760
    %v369 = vsub.f32 %v65, %v368
    %v370 = vand.u32 %v369, 4294901760
    %371 = vmatpush.msra.mxu0 %v370
    %v372 = vand.u32 %v64, 4294901760
    %v373 = vsub.f32 %v64, %v372
    %v374 = vand.u32 %v373, 4294901760
    %375 = vmatpush.msra.mxu0 %v374
    %v376 = vand.u32 %v63, 4294901760
    %v377 = vsub.f32 %v63, %v376
    %v378 = vand.u32 %v377, 4294901760
    %379 = vmatpush.msra.mxu0 %v378
    %v380 = vand.u32 %v62, 4294901760
    %v381 = vsub.f32 %v62, %v380
    %v382 = vand.u32 %v381, 4294901760
    %383 = vmatpush.msra.mxu0 %v382
    %v384 = vand.u32 %v61, 4294901760
    %v385 = vsub.f32 %v61, %v384
    %v386 = vand.u32 %v385, 4294901760
    %387 = vmatpush.msra.mxu0 %v386
    %v388 = vand.u32 %v60, 4294901760
    %v389 = vsub.f32 %v60, %v388
    %v390 = vand.u32 %v389, 4294901760
    %391 = vmatpush.msra.mxu0 %v390
    %v392 = vand.u32 %v59, 4294901760
    %v393 = vsub.f32 %v59, %v392
    %v394 = vand.u32 %v393, 4294901760
    %395 = vmatpush.msra.mxu0 %v394
    %v396 = vand.u32 %v58, 4294901760
    %397 = vmatmul.f32.gmra.mxu0 %v396
    %v398 = vpop.f32.mrf.mxu0
    %v399 = vadd.f32 %v330, %v398
    %400 = vdwg.mxu0
    %v401 = vand.u32 %v74, 4294901760
    %402 = vmatpush.msra.mxu0 %v401
    %v403 = vand.u32 %v73, 4294901760
    %404 = vmatpush.msra.mxu0 %v403
    %v405 = vand.u32 %v72, 4294901760
    %406 = vmatpush.msra.mxu0 %v405
    %v407 = vand.u32 %v71, 4294901760
    %408 = vmatpush.msra.mxu0 %v407
    %v409 = vand.u32 %v70, 4294901760
    %410 = vmatpush.msra.mxu0 %v409
    %v411 = vand.u32 %v69, 4294901760
    %412 = vmatpush.msra.mxu0 %v411
    %v413 = vand.u32 %v68, 4294901760
    %414 = vmatpush.msra.mxu0 %v413
    %v415 = vand.u32 %v67, 4294901760
    %416 = vmatpush.msra.mxu0 %v415
    %v417 = vand.u32 %v66, 4294901760
    %418 = vmatpush.msra.mxu0 %v417
    %v419 = vand.u32 %v65, 4294901760
    %420 = vmatpush.msra.mxu0 %v419
    %v421 = vand.u32 %v64, 4294901760
    %422 = vmatpush.msra.mxu0 %v421
    %v423 = vand.u32 %v63, 4294901760
    %424 = vmatpush.msra.mxu0 %v423
    %v425 = vand.u32 %v62, 4294901760
    %426 = vmatpush.msra.mxu0 %v425
    %v427 = vand.u32 %v61, 4294901760
    %428 = vmatpush.msra.mxu0 %v427
    %v429 = vand.u32 %v60, 4294901760
    %430 = vmatpush.msra.mxu0 %v429
    %v431 = vand.u32 %v59, 4294901760
    %432 = vmatpush.msra.mxu0 %v431
    %v433 = vand.u32 %v58, 4294901760
    %434 = vmatmul.f32.gmra.mxu0 %v433
    %v435 = vpop.f32.mrf.mxu0
    %v436 = vadd.f32 %v399, %v435
    %437 = vdwg.mxu0
    %vm438 = vcmp.gt.f32.partialorder %v436, 0.0
    %v439 = vmul.f32 %v436, 0.01
    %v440 = vsel %vm438, %v436, %v439
    %v441 = vperm.slane %v93, 0
    %v442 = vand.u32 %v91, 4294901760
    %443 = vmatpush.msra.mxu0 %v442
    %v444 = vand.u32 %v90, 4294901760
    %445 = vmatpush.msra.mxu0 %v444
    %v446 = vand.u32 %v89, 4294901760
    %447 = vmatpush.msra.mxu0 %v446
    %v448 = vand.u32 %v88, 4294901760
    %449 = vmatpush.msra.mxu0 %v448
    %v450 = vand.u32 %v87, 4294901760
    %451 = vmatpush.msra.mxu0 %v450
    %v452 = vand.u32 %v86, 4294901760
    %453 = vmatpush.msra.mxu0 %v452
    %v454 = vand.u32 %v85, 4294901760
    %455 = vmatpush.msra.mxu0 %v454
    %v456 = vand.u32 %v84, 4294901760
    %457 = vmatpush.msra.mxu0 %v456
    %v458 = vand.u32 %v83, 4294901760
    %459 = vmatpush.msra.mxu0 %v458
    %v460 = vand.u32 %v82, 4294901760
    %461 = vmatpush.msra.mxu0 %v460
    %v462 = vand.u32 %v81, 4294901760
    %463 = vmatpush.msra.mxu0 %v462
    %v464 = vand.u32 %v80, 4294901760
    %465 = vmatpush.msra.mxu0 %v464
    %v466 = vand.u32 %v79, 4294901760
    %467 = vmatpush.msra.mxu0 %v466
    %v468 = vand.u32 %v78, 4294901760
    %469 = vmatpush.msra.mxu0 %v468
    %v470 = vand.u32 %v77, 4294901760
    %471 = vmatpush.msra.mxu0 %v470
    %v472 = vand.u32 %v76, 4294901760
    %473 = vmatpush.msra.mxu0 %v472
    %v474 = vand.u32 %v440, 4294901760
    %v475 = vsub.f32 %v440, %v474
    %v476 = vand.u32 %v475, 4294901760
    %v477 = vsub.f32 %v475, %v476
    %v478 = vand.u32 %v477, 4294901760
    %479 = vmatmul.f32.gmra.mxu0 %v478
    %v480 = vpop.f32.mrf.mxu0
    %v481 = vadd.f32 %v441, %v480
    %482 = vdwg.mxu0
    %v483 = vand.u32 %v91, 4294901760
    %v484 = vsub.f32 %v91, %v483
    %v485 = vand.u32 %v484, 4294901760
    %v486 = vsub.f32 %v484, %v485
    %v487 = vand.u32 %v486, 4294901760
    %488 = vmatpush.msra.mxu0 %v487
    %v489 = vand.u32 %v90, 4294901760
    %v490 = vsub.f32 %v90, %v489
    %v491 = vand.u32 %v490, 4294901760
    %v492 = vsub.f32 %v490, %v491
    %v493 = vand.u32 %v492, 4294901760
    %494 = vmatpush.msra.mxu0 %v493
    %v495 = vand.u32 %v89, 4294901760
    %v496 = vsub.f32 %v89, %v495
    %v497 = vand.u32 %v496, 4294901760
    %v498 = vsub.f32 %v496, %v497
    %v499 = vand.u32 %v498, 4294901760
    %500 = vmatpush.msra.mxu0 %v499
    %v501 = vand.u32 %v88, 4294901760
    %v502 = vsub.f32 %v88, %v501
    %v503 = vand.u32 %v502, 4294901760
    %v504 = vsub.f32 %v502, %v503
    %v505 = vand.u32 %v504, 4294901760
    %506 = vmatpush.msra.mxu0 %v505
    %v507 = vand.u32 %v87, 4294901760
    %v508 = vsub.f32 %v87, %v507
    %v509 = vand.u32 %v508, 4294901760
    %v510 = vsub.f32 %v508, %v509
    %v511 = vand.u32 %v510, 4294901760
    %512 = vmatpush.msra.mxu0 %v511
    %v513 = vand.u32 %v86, 4294901760
    %v514 = vsub.f32 %v86, %v513
    %v515 = vand.u32 %v514, 4294901760
    %v516 = vsub.f32 %v514, %v515
    %v517 = vand.u32 %v516, 4294901760
    %518 = vmatpush.msra.mxu0 %v517
    %v519 = vand.u32 %v85, 4294901760
    %v520 = vsub.f32 %v85, %v519
    %v521 = vand.u32 %v520, 4294901760
    %v522 = vsub.f32 %v520, %v521
    %v523 = vand.u32 %v522, 4294901760
    %524 = vmatpush.msra.mxu0 %v523
    %v525 = vand.u32 %v84, 4294901760
    %v526 = vsub.f32 %v84, %v525
    %v527 = vand.u32 %v526, 4294901760
    %v528 = vsub.f32 %v526, %v527
    %v529 = vand.u32 %v528, 4294901760
    %530 = vmatpush.msra.mxu0 %v529
    %v531 = vand.u32 %v83, 4294901760
    %v532 = vsub.f32 %v83, %v531
    %v533 = vand.u32 %v532, 4294901760
    %v534 = vsub.f32 %v532, %v533
    %v535 = vand.u32 %v534, 4294901760
    %536 = vmatpush.msra.mxu0 %v535
    %v537 = vand.u32 %v82, 4294901760
    %v538 = vsub.f32 %v82, %v537
    %v539 = vand.u32 %v538, 4294901760
    %v540 = vsub.f32 %v538, %v539
    %v541 = vand.u32 %v540, 4294901760
    %542 = vmatpush.msra.mxu0 %v541
    %v543 = vand.u32 %v81, 4294901760
    %v544 = vsub.f32 %v81, %v543
    %v545 = vand.u32 %v544, 4294901760
    %v546 = vsub.f32 %v544, %v545
    %v547 = vand.u32 %v546, 4294901760
    %548 = vmatpush.msra.mxu0 %v547
    %v549 = vand.u32 %v80, 4294901760
    %v550 = vsub.f32 %v80, %v549
    %v551 = vand.u32 %v550, 4294901760
    %v552 = vsub.f32 %v550, %v551
    %v553 = vand.u32 %v552, 4294901760
    %554 = vmatpush.msra.mxu0 %v553
    %v555 = vand.u32 %v79, 4294901760
    %v556 = vsub.f32 %v79, %v555
    %v557 = vand.u32 %v556, 4294901760
    %v558 = vsub.f32 %v556, %v557
    %v559 = vand.u32 %v558, 4294901760
    %560 = vmatpush.msra.mxu0 %v559
    %v561 = vand.u32 %v78, 4294901760
    %v562 = vsub.f32 %v78, %v561
    %v563 = vand.u32 %v562, 4294901760
    %v564 = vsub.f32 %v562, %v563
    %v565 = vand.u32 %v564, 4294901760
    %566 = vmatpush.msra.mxu0 %v565
    %v567 = vand.u32 %v77, 4294901760
    %v568 = vsub.f32 %v77, %v567
    %v569 = vand.u32 %v568, 4294901760
    %v570 = vsub.f32 %v568, %v569
    %v571 = vand.u32 %v570, 4294901760
    %572 = vmatpush.msra.mxu0 %v571
    %v573 = vand.u32 %v76, 4294901760
    %v574 = vsub.f32 %v76, %v573
    %v575 = vand.u32 %v574, 4294901760
    %v576 = vsub.f32 %v574, %v575
    %v577 = vand.u32 %v576, 4294901760
    %578 = vmatpush.msra.mxu0 %v577
    %v579 = vand.u32 %v440, 4294901760
    %580 = vmatmul.f32.gmra.mxu0 %v579
    %v581 = vpop.f32.mrf.mxu0
    %v582 = vadd.f32 %v481, %v581
    %583 = vdwg.mxu0
    %v584 = vand.u32 %v91, 4294901760
    %v585 = vsub.f32 %v91, %v584
    %586 = vmatpush.msra.mxu0 %v585
    %v587 = vand.u32 %v90, 4294901760
    %v588 = vsub.f32 %v90, %v587
    %589 = vmatpush.msra.mxu0 %v588
    %v590 = vand.u32 %v89, 4294901760
    %v591 = vsub.f32 %v89, %v590
    %592 = vmatpush.msra.mxu0 %v591
    %v593 = vand.u32 %v88, 4294901760
    %v594 = vsub.f32 %v88, %v593
    %595 = vmatpush.msra.mxu0 %v594
    %v596 = vand.u32 %v87, 4294901760
    %v597 = vsub.f32 %v87, %v596
    %598 = vmatpush.msra.mxu0 %v597
    %v599 = vand.u32 %v86, 4294901760
    %v600 = vsub.f32 %v86, %v599
    %601 = vmatpush.msra.mxu0 %v600
    %v602 = vand.u32 %v85, 4294901760
    %v603 = vsub.f32 %v85, %v602
    %604 = vmatpush.msra.mxu0 %v603
    %v605 = vand.u32 %v84, 4294901760
    %v606 = vsub.f32 %v84, %v605
    %607 = vmatpush.msra.mxu0 %v606
    %v608 = vand.u32 %v83, 4294901760
    %v609 = vsub.f32 %v83, %v608
    %610 = vmatpush.msra.mxu0 %v609
    %v611 = vand.u32 %v82, 4294901760
    %v612 = vsub.f32 %v82, %v611
    %613 = vmatpush.msra.mxu0 %v612
    %v614 = vand.u32 %v81, 4294901760
    %v615 = vsub.f32 %v81, %v614
    %616 = vmatpush.msra.mxu0 %v615
    %v617 = vand.u32 %v80, 4294901760
    %v618 = vsub.f32 %v80, %v617
    %619 = vmatpush.msra.mxu0 %v618
    %v620 = vand.u32 %v79, 4294901760
    %v621 = vsub.f32 %v79, %v620
    %622 = vmatpush.msra.mxu0 %v621
    %v623 = vand.u32 %v78, 4294901760
    %v624 = vsub.f32 %v78, %v623
    %625 = vmatpush.msra.mxu0 %v624
    %v626 = vand.u32 %v77, 4294901760
    %v627 = vsub.f32 %v77, %v626
    %628 = vmatpush.msra.mxu0 %v627
    %v629 = vand.u32 %v76, 4294901760
    %v630 = vsub.f32 %v76, %v629
    %631 = vmatpush.msra.mxu0 %v630
    %v632 = vand.u32 %v440, 4294901760
    %v633 = vsub.f32 %v440, %v632
    %634 = vmatmul.f32.gmra.mxu0 %v633
    %v635 = vpop.f32.mrf.mxu0
    %v636 = vadd.f32 %v582, %v635
    %637 = vdwg.mxu0
    %v638 = vand.u32 %v91, 4294901760
    %639 = vmatpush.msra.mxu0 %v638
    %v640 = vand.u32 %v90, 4294901760
    %641 = vmatpush.msra.mxu0 %v640
    %v642 = vand.u32 %v89, 4294901760
    %643 = vmatpush.msra.mxu0 %v642
    %v644 = vand.u32 %v88, 4294901760
    %645 = vmatpush.msra.mxu0 %v644
    %v646 = vand.u32 %v87, 4294901760
    %647 = vmatpush.msra.mxu0 %v646
    %v648 = vand.u32 %v86, 4294901760
    %649 = vmatpush.msra.mxu0 %v648
    %v650 = vand.u32 %v85, 4294901760
    %651 = vmatpush.msra.mxu0 %v650
    %v652 = vand.u32 %v84, 4294901760
    %653 = vmatpush.msra.mxu0 %v652
    %v654 = vand.u32 %v83, 4294901760
    %655 = vmatpush.msra.mxu0 %v654
    %v656 = vand.u32 %v82, 4294901760
    %657 = vmatpush.msra.mxu0 %v656
    %v658 = vand.u32 %v81, 4294901760
    %659 = vmatpush.msra.mxu0 %v658
    %v660 = vand.u32 %v80, 4294901760
    %661 = vmatpush.msra.mxu0 %v660
    %v662 = vand.u32 %v79, 4294901760
    %663 = vmatpush.msra.mxu0 %v662
    %v664 = vand.u32 %v78, 4294901760
    %665 = vmatpush.msra.mxu0 %v664
    %v666 = vand.u32 %v77, 4294901760
    %667 = vmatpush.msra.mxu0 %v666
    %v668 = vand.u32 %v76, 4294901760
    %669 = vmatpush.msra.mxu0 %v668
    %v670 = vand.u32 %v440, 4294901760
    %v671 = vsub.f32 %v440, %v670
    %v672 = vand.u32 %v671, 4294901760
    %673 = vmatmul.f32.gmra.mxu0 %v672
    %v674 = vpop.f32.mrf.mxu0
    %v675 = vadd.f32 %v636, %v674
    %676 = vdwg.mxu0
    %v677 = vand.u32 %v91, 4294901760
    %v678 = vsub.f32 %v91, %v677
    %v679 = vand.u32 %v678, 4294901760
    %680 = vmatpush.msra.mxu0 %v679
    %v681 = vand.u32 %v90, 4294901760
    %v682 = vsub.f32 %v90, %v681
    %v683 = vand.u32 %v682, 4294901760
    %684 = vmatpush.msra.mxu0 %v683
    %v685 = vand.u32 %v89, 4294901760
    %v686 = vsub.f32 %v89, %v685
    %v687 = vand.u32 %v686, 4294901760
    %688 = vmatpush.msra.mxu0 %v687
    %v689 = vand.u32 %v88, 4294901760
    %v690 = vsub.f32 %v88, %v689
    %v691 = vand.u32 %v690, 4294901760
    %692 = vmatpush.msra.mxu0 %v691
    %v693 = vand.u32 %v87, 4294901760
    %v694 = vsub.f32 %v87, %v693
    %v695 = vand.u32 %v694, 4294901760
    %696 = vmatpush.msra.mxu0 %v695
    %v697 = vand.u32 %v86, 4294901760
    %v698 = vsub.f32 %v86, %v697
    %v699 = vand.u32 %v698, 4294901760
    %700 = vmatpush.msra.mxu0 %v699
    %v701 = vand.u32 %v85, 4294901760
    %v702 = vsub.f32 %v85, %v701
    %v703 = vand.u32 %v702, 4294901760
    %704 = vmatpush.msra.mxu0 %v703
    %v705 = vand.u32 %v84, 4294901760
    %v706 = vsub.f32 %v84, %v705
    %v707 = vand.u32 %v706, 4294901760
    %708 = vmatpush.msra.mxu0 %v707
    %v709 = vand.u32 %v83, 4294901760
    %v710 = vsub.f32 %v83, %v709
    %v711 = vand.u32 %v710, 4294901760
    %712 = vmatpush.msra.mxu0 %v711
    %v713 = vand.u32 %v82, 4294901760
    %v714 = vsub.f32 %v82, %v713
    %v715 = vand.u32 %v714, 4294901760
    %716 = vmatpush.msra.mxu0 %v715
    %v717 = vand.u32 %v81, 4294901760
    %v718 = vsub.f32 %v81, %v717
    %v719 = vand.u32 %v718, 4294901760
    %720 = vmatpush.msra.mxu0 %v719
    %v721 = vand.u32 %v80, 4294901760
    %v722 = vsub.f32 %v80, %v721
    %v723 = vand.u32 %v722, 4294901760
    %724 = vmatpush.msra.mxu0 %v723
    %v725 = vand.u32 %v79, 4294901760
    %v726 = vsub.f32 %v79, %v725
    %v727 = vand.u32 %v726, 4294901760
    %728 = vmatpush.msra.mxu0 %v727
    %v729 = vand.u32 %v78, 4294901760
    %v730 = vsub.f32 %v78, %v729
    %v731 = vand.u32 %v730, 4294901760
    %732 = vmatpush.msra.mxu0 %v731
    %v733 = vand.u32 %v77, 4294901760
    %v734 = vsub.f32 %v77, %v733
    %v735 = vand.u32 %v734, 4294901760
    %736 = vmatpush.msra.mxu0 %v735
    %v737 = vand.u32 %v76, 4294901760
    %v738 = vsub.f32 %v76, %v737
    %v739 = vand.u32 %v738, 4294901760
    %740 = vmatpush.msra.mxu0 %v739
    %v741 = vand.u32 %v440, 4294901760
    %742 = vmatmul.f32.gmra.mxu0 %v741
    %v743 = vpop.f32.mrf.mxu0
    %v744 = vadd.f32 %v675, %v743
    %745 = vdwg.mxu0
    %v746 = vand.u32 %v91, 4294901760
    %747 = vmatpush.msra.mxu0 %v746
    %v748 = vand.u32 %v90, 4294901760
    %749 = vmatpush.msra.mxu0 %v748
    %v750 = vand.u32 %v89, 4294901760
    %751 = vmatpush.msra.mxu0 %v750
    %v752 = vand.u32 %v88, 4294901760
    %753 = vmatpush.msra.mxu0 %v752
    %v754 = vand.u32 %v87, 4294901760
    %755 = vmatpush.msra.mxu0 %v754
    %v756 = vand.u32 %v86, 4294901760
    %757 = vmatpush.msra.mxu0 %v756
    %v758 = vand.u32 %v85, 4294901760
    %759 = vmatpush.msra.mxu0 %v758
    %v760 = vand.u32 %v84, 4294901760
    %761 = vmatpush.msra.mxu0 %v760
    %v762 = vand.u32 %v83, 4294901760
    %763 = vmatpush.msra.mxu0 %v762
    %v764 = vand.u32 %v82, 4294901760
    %765 = vmatpush.msra.mxu0 %v764
    %v766 = vand.u32 %v81, 4294901760
    %767 = vmatpush.msra.mxu0 %v766
    %v768 = vand.u32 %v80, 4294901760
    %769 = vmatpush.msra.mxu0 %v768
    %v770 = vand.u32 %v79, 4294901760
    %771 = vmatpush.msra.mxu0 %v770
    %v772 = vand.u32 %v78, 4294901760
    %773 = vmatpush.msra.mxu0 %v772
    %v774 = vand.u32 %v77, 4294901760
    %775 = vmatpush.msra.mxu0 %v774
    %v776 = vand.u32 %v76, 4294901760
    %777 = vmatpush.msra.mxu0 %v776
    %v778 = vand.u32 %v440, 4294901760
    %779 = vmatmul.f32.gmra.mxu0 %v778
    %v780 = vpop.f32.mrf.mxu0
    %v781 = vadd.f32 %v744, %v780
    %782 = vdwg.mxu0
    %vm783 = vcmp.gt.f32.partialorder %v781, 0.0
    %v784 = vmul.f32 %v781, 0.01
    %v785 = vsel %vm783, %v781, %v784
    %v786 = vperm.slane %v94, 0
    %v787 = vmul.f32 %v785, %v786
    %788 = vadd.xlane.f32.xlu0 %v787
    %v789 = vpop.xlane.xlu0 %788
    %v790 = vperm.slane %v95, 0
    %v791 = vadd.f32 %v789, %v790
    %792 = vst [vmem:[#allocation8] sm:$0xff] %v791
    // Predicated region
    $region26: #{tpu_custom_call.1} parent=1 // pred_check
      _
    $region27: #{tpu_custom_call.1} parent=1 // pred_check_branch
      %794 = sbr.rel (0) target = $region29
    $region28: #{tpu_custom_call.1} parent=1 // pred_region
      %796 = vsyncadd [#allocation4], 0
      %s798 = sshll.u32 [#allocation8], 4
      %s799 = int_to_ptr.vmem [resolvable:$true] %s798
      %s800 = sshll.u32 %s3, 4
      %s801 = int_to_ptr.hbm [resolvable:$true] %s800
      %803 = dma.vmem_to_hbm [thread:$0]  %s799, 128, %s801, [#allocation4]
    $region29: #{tpu_custom_call.1} parent=1 // pred_fallthru
      _
    // Predicated region
    $region30: #{tpu_custom_call.1} parent=1 // pred_check
      _
    $region31: #{tpu_custom_call.1} parent=1 // pred_check_branch
      %805 = sbr.rel (0) target = $region33
    $region32: #{tpu_custom_call.1} parent=1 // pred_region
      %807 = dma.done [#allocation4], 128
    $region33: #{tpu_custom_call.1} parent=1 // pred_fallthru
      _
    %808 = vsyncpa [#allocation3], 1
    %809 = vsyncpa [#allocation6], 1
    %810 = vsyncpa [#allocation4], 1

</llo_original>
